<compile_context>
chip_gen: v5e
topology: v5e:2x2
jax: 0.10.0
libtpu: 0.0.40
codegen_flags: <defaults>
</compile_context>

<pallas_src>
import functools

import jax
import jax.numpy as jnp
from jax.experimental import pallas as pl
from jax.experimental.pallas import tpu as pltpu


def _attn_pool_kernel(x_ref, wc_ref, bc_ref, w1_ref, b1_ref, wa_ref, out_ref,
                      *, use_bf16_matmul=False):
    bt, s, d_in = x_ref.shape
    hidden = w1_ref.shape[1]

    # Flatten (B_TILE, S, D_in) -> (B_TILE*S, D_in) so both linear layers are
    # single larger MXU matmuls instead of per-batch tiny ones.
    # TODO(synk): confirm via pl.lower_as_mlir that this merge of leading dims
    # (last dim unchanged, S a multiple of 8) stays a layout no-op.
    xm = x_ref[...].reshape(bt * s, d_in)                        # (M, D_in)
    wc = wc_ref[...]
    w1 = w1_ref[...]

    if use_bf16_matmul:
        # bf16 MXU inputs with f32 accumulation (2-4x matmul-cycle win on
        # v5e/v6e/v7x); only worthwhile / tolerable once dims are scaled up.
        xm_a, wc_a = xm.astype(jnp.bfloat16), wc.astype(jnp.bfloat16)
    else:
        xm_a, wc_a = xm, wc

    # connector: Linear(D_in -> bottleneck) + ReLU
    h1 = jnp.dot(xm_a, wc_a, preferred_element_type=jnp.float32)
    h1 = jnp.maximum(h1 + bc_ref[...], 0.0)                      # (M, bneck)

    if use_bf16_matmul:
        h1_a, w1_a = h1.astype(jnp.bfloat16), w1.astype(jnp.bfloat16)
    else:
        h1_a, w1_a = h1, w1

    # fc1: Linear(bottleneck -> hidden) + tanh
    h2 = jnp.dot(h1_a, w1_a, preferred_element_type=jnp.float32)
    h2 = jnp.tanh(h2 + b1_ref[...])                              # (M, hidden)

    h2_3d = h2.reshape(bt, s, hidden)                            # (BT, S, H)

    # attention_linear as a VPU lane reduction (avoids an N=1 MXU matmul).
    # The attention bias is omitted: softmax over the sequence axis is
    # invariant to a constant shift, so the result is unchanged.
    logits = jnp.sum(h2_3d * wa_ref[...], axis=-1, keepdims=True)  # (BT, S, 1)

    # Shifted softmax over the sequence axis; the normalization is folded into
    # the final pooled multiply so the attention weights never materialize.
    m = jnp.max(logits, axis=1, keepdims=True)
    e = jnp.exp(logits - m)                                      # (BT, S, 1)
    denom = jnp.sum(e, axis=1, keepdims=True)                    # (BT, 1, 1)
    inv = pl.reciprocal(denom.reshape(bt, 1), approx=False)      # EUP slot

    # Weighted (unnormalized) sum over sequence, then normalize once.
    # TODO(synk): for large S make this an MXU contraction ('bsh,bs1->bh')
    # and pad hidden to a multiple of 128 for lane-dense output stores.
    pooled = jnp.sum(h2_3d * e, axis=1)                          # (BT, H)
    out_ref[...] = pooled * inv                                  # (BT, H)


def _tpu_vmem_and_cores():
    """Best-effort query of per-core VMEM capacity and TensorCores/device."""
    vmem_cap = 64 * 1024 * 1024  # conservative default (v7x per-TC VMEM)
    try:
        info = pltpu.get_tpu_info()
        vmem_cap = int(getattr(info, "vmem_capacity_bytes", vmem_cap))
    except Exception:
        pass
    num_tc = 1
    try:
        kind = jax.devices()[0].device_kind.lower()
        # v7x has 2 TensorCores per chip; v4/v5p present as megacore.
        if "7" in kind or "v4" in kind or "v5p" in kind:
            num_tc = 2
    except Exception:
        pass
    return vmem_cap, num_tc


def _pick_b_tile(B, S, D_in, bottleneck, hidden, vmem_budget, num_tc):
    """Pick the batch tile.

    Policy:
      * candidate tiles are B itself or divisors of B that are multiples of 8
        (keeps the output block's sublane dim legal under the (8,128) rule),
      * on single-TC chips (v5e/v6e): largest tile that fits the budget,
      * on 2-TC chips (v7x): largest tile that still leaves >= num_tc grid
        steps so the "parallel" axis shards across cores (if such a tile
        exists and fits),
      * raise loudly if nothing fits instead of silently blowing VMEM.
    """

    def cost(bt):
        m = bt * S
        weights = (D_in * bottleneck + bottleneck          # wc, bc
                   + bottleneck * hidden + hidden          # w1, b1
                   + hidden)                               # wa
        acts = (m * bottleneck                             # h1
                + 2 * m * hidden                           # h2 (2-D + 3-D live)
                + 3 * bt * S                               # logits, e, pooled tmp
                + bt * hidden)                             # pooled
        io = 2 * bt * S * D_in + 2 * bt * hidden           # dbl-buffered in/out
        return 4 * (2 * weights + acts + io)               # f32 bytes, weights dbl-buf

    candidates = sorted({B} | {t for t in range(8, B, 8) if B % t == 0})
    feasible = [t for t in candidates if cost(t) <= vmem_budget]
    if not feasible:
        raise ValueError(
            f"No batch tile fits the VMEM budget ({vmem_budget} bytes) for "
            f"B={B}, S={S}, D_in={D_in}, bottleneck={bottleneck}, "
            f"hidden={hidden}; reduce dims or raise the budget.")

    if num_tc > 1:
        split = [t for t in feasible if (B // t) >= num_tc]
        if split:
            return max(split)
    return max(feasible)


def attention_pool(features, wc, bc, w1, b1, wa, ba=None, *, b_tile=None,
                   use_bf16_matmul=False):
    """features: (B, S, D_in) f32.  wa: (1, hidden) row.
    ba (attention bias) is accepted for interface fidelity but unused: the
    softmax over the sequence axis is invariant to the constant shift.
    Returns (B, hidden) f32."""
    del ba  # mathematically redundant under softmax shift-invariance
    B, S, D_in = features.shape
    bottleneck = wc.shape[1]
    hidden = w1.shape[1]

    vmem_cap, num_tc = _tpu_vmem_and_cores()
    vmem_budget = int(0.35 * vmem_cap)                   # ~22 MiB v7x, ~45 MiB v5e/v6e
    vmem_limit = max(32 << 20, min(int(0.8 * vmem_cap), 100 << 20))

    if b_tile is None:
        b_tile = _pick_b_tile(B, S, D_in, bottleneck, hidden, vmem_budget,
                              num_tc)
    assert B % b_tile == 0, "batch must be divisible by the batch tile"

    grid = (B // b_tile,)
    full = lambda b: (0, 0)

    kernel = functools.partial(_attn_pool_kernel,
                               use_bf16_matmul=use_bf16_matmul)

    return pl.pallas_call(
        kernel,
        out_shape=jax.ShapeDtypeStruct((B, hidden), jnp.float32),
        grid_spec=pltpu.PrefetchScalarGridSpec(
            num_scalar_prefetch=0,
            grid=grid,
            in_specs=[
                pl.BlockSpec((b_tile, S, D_in), lambda b: (b, 0, 0)),
                pl.BlockSpec((D_in, bottleneck), full),
                pl.BlockSpec((1, bottleneck), full),
                pl.BlockSpec((bottleneck, hidden), full),
                pl.BlockSpec((1, hidden), full),
                pl.BlockSpec((1, hidden), full),                    # wa row
            ],
            out_specs=pl.BlockSpec((b_tile, hidden), lambda b: (b, 0)),
        ),
        compiler_params=pltpu.CompilerParams(
            dimension_semantics=("parallel",),
            vmem_limit_bytes=vmem_limit),
    )(features, wc, bc, w1, b1, wa)


def reference(features, wc, bc, w1, b1, wa, ba):
    h1 = jax.nn.relu(features @ wc + bc)
    h2 = jnp.tanh(h1 @ w1 + b1)
    logits = jnp.sum(h2 * wa, axis=-1, keepdims=True) + ba      # (B, S, 1)
    attn = jax.nn.softmax(logits, axis=1)
    return jnp.sum(h2 * attn, axis=1)


if __name__ == "__main__":
    # Small shapes consistent with the module's forward pass.
    B, S = 2, 8
    input_dim, bottleneck_dim, hidden_dim = 32, 16, 32

    key = jax.random.PRNGKey(0)
    ks = jax.random.split(key, 7)
    features = jax.random.normal(ks[0], (B, S, input_dim), jnp.float32)

    # Weights stored as (in, out) so the kernel does x @ W; attention weight
    # kept as its natural (1, hidden) row (PyTorch Linear(hidden, 1).weight).
    wc = jax.random.normal(ks[1], (input_dim, bottleneck_dim), jnp.float32) * 0.1
    bc = jax.random.normal(ks[2], (1, bottleneck_dim), jnp.float32) * 0.1
    w1 = jax.random.normal(ks[3], (bottleneck_dim, hidden_dim), jnp.float32) * 0.1
    b1 = jax.random.normal(ks[4], (1, hidden_dim), jnp.float32) * 0.1
    wa = jax.random.normal(ks[5], (1, hidden_dim), jnp.float32) * 0.1
    ba = jax.random.normal(ks[6], (1,), jnp.float32) * 0.1

    # f32 matmuls in the demo to preserve the 1e-5 match; set
    # use_bf16_matmul=True (and relax tolerance to ~1e-2) for scaled-up dims.
    out = attention_pool(features, wc, bc, w1, b1, wa, ba,
                         use_bf16_matmul=False)
    out = jax.block_until_ready(out)

    ref = reference(features, wc, bc, w1, b1, wa, ba)
    assert out.shape == (B, hidden_dim)
    assert jnp.allclose(out, ref, atol=1e-5, rtol=1e-5)

    print("KERNEL_OK")
</pallas_src>

<mosaic_0001>
module attributes {stable_mosaic.version = 11 : i64} {
  func.func @_attn_pool_kernel(%arg0: i32, %arg1: memref<2x8x32xf32, #tpu.memory_space<vmem>>, %arg2: memref<32x16xf32, #tpu.memory_space<vmem>>, %arg3: memref<1x16xf32, #tpu.memory_space<vmem>>, %arg4: memref<16x32xf32, #tpu.memory_space<vmem>>, %arg5: memref<1x32xf32, #tpu.memory_space<vmem>>, %arg6: memref<1x32xf32, #tpu.memory_space<vmem>>, %arg7: memref<2x32xf32, #tpu.memory_space<vmem>>) attributes {dimension_semantics = [#tpu.dimension_semantics<parallel>], iteration_bounds = array<i64: 1>, scalar_prefetch = 0 : i64, scratch_operands = 0 : i64, tpu.core_type = #tpu.core_type<tc>, window_params = [{transform_indices = @transform_0, window_bounds = array<i64: 2, 8, 32>}, {pipeline_mode = #tpu.pipeline_mode<synchronous>, transform_indices = @transform_1, window_bounds = array<i64: 32, 16>}, {pipeline_mode = #tpu.pipeline_mode<synchronous>, transform_indices = @transform_2, window_bounds = array<i64: 1, 16>}, {pipeline_mode = #tpu.pipeline_mode<synchronous>, transform_indices = @transform_3, window_bounds = array<i64: 16, 32>}, {pipeline_mode = #tpu.pipeline_mode<synchronous>, transform_indices = @transform_4, window_bounds = array<i64: 1, 32>}, {pipeline_mode = #tpu.pipeline_mode<synchronous>, transform_indices = @transform_5, window_bounds = array<i64: 1, 32>}, {transform_indices = @transform_6, window_bounds = array<i64: 2, 32>}]} {
    %c0 = arith.constant 0 : index
    %c0_0 = arith.constant 0 : index
    %c0_1 = arith.constant 0 : index
    %0 = vector.load %arg1[%c0, %c0_0, %c0_1] : memref<2x8x32xf32, #tpu.memory_space<vmem>>, vector<2x8x32xf32>
    %1 = vector.shape_cast %0 : vector<2x8x32xf32> to vector<16x32xf32>
    %c0_2 = arith.constant 0 : index
    %c0_3 = arith.constant 0 : index
    %2 = vector.load %arg2[%c0_2, %c0_3] : memref<32x16xf32, #tpu.memory_space<vmem>>, vector<32x16xf32>
    %c0_4 = arith.constant 0 : index
    %c0_5 = arith.constant 0 : index
    %3 = vector.load %arg4[%c0_4, %c0_5] : memref<16x32xf32, #tpu.memory_space<vmem>>, vector<16x32xf32>
    %cst = arith.constant dense<0.000000e+00> : vector<16x16xf32>
    %4 = tpu.matmul %1, %2, %cst {dimension_numbers = #tpu.dot_dimension_numbers<[1], [0], [0], [1], [0, 0, 1, 1], [], []>} : vector<16x32xf32>, vector<32x16xf32>, vector<16x16xf32> -> vector<16x16xf32>
    %c0_6 = arith.constant 0 : index
    %c0_7 = arith.constant 0 : index
    %5 = vector.load %arg3[%c0_6, %c0_7] : memref<1x16xf32, #tpu.memory_space<vmem>>, vector<1x16xf32>
    %6 = vector.broadcast %5 : vector<1x16xf32> to vector<16x16xf32>
    %7 = arith.addf %4, %6 : vector<16x16xf32>
    %cst_8 = arith.constant 0.000000e+00 : f32
    %8 = vector.broadcast %cst_8 : f32 to vector<16x16xf32>
    %9 = arith.maximumf %7, %8 : vector<16x16xf32>
    %cst_9 = arith.constant dense<0.000000e+00> : vector<16x32xf32>
    %10 = tpu.matmul %9, %3, %cst_9 {dimension_numbers = #tpu.dot_dimension_numbers<[1], [0], [0], [1], [0, 0, 1, 1], [], []>} : vector<16x16xf32>, vector<16x32xf32>, vector<16x32xf32> -> vector<16x32xf32>
    %c0_10 = arith.constant 0 : index
    %c0_11 = arith.constant 0 : index
    %11 = vector.load %arg5[%c0_10, %c0_11] : memref<1x32xf32, #tpu.memory_space<vmem>>, vector<1x32xf32>
    %12 = vector.broadcast %11 : vector<1x32xf32> to vector<16x32xf32>
    %13 = arith.addf %10, %12 : vector<16x32xf32>
    %14 = math.tanh %13 : vector<16x32xf32>
    %15 = vector.shape_cast %14 : vector<16x32xf32> to vector<2x8x32xf32>
    %c0_12 = arith.constant 0 : index
    %c0_13 = arith.constant 0 : index
    %16 = vector.load %arg6[%c0_12, %c0_13] : memref<1x32xf32, #tpu.memory_space<vmem>>, vector<1x32xf32>
    %17 = vector.shape_cast %16 : vector<1x32xf32> to vector<1x1x32xf32>
    %18 = vector.broadcast %17 : vector<1x1x32xf32> to vector<2x8x32xf32>
    %19 = arith.mulf %15, %18 : vector<2x8x32xf32>
    %cst_14 = arith.constant dense<0.000000e+00> : vector<2x8xf32>
    %20 = vector.multi_reduction <add>, %19, %cst_14 [2] : vector<2x8x32xf32> to vector<2x8xf32>
    %21 = vector.shape_cast %20 : vector<2x8xf32> to vector<2x8x1xf32>
    %cst_15 = arith.constant dense<0xFF800000> : vector<2x1xf32>
    %22 = vector.multi_reduction <maximumf>, %21, %cst_15 [1] : vector<2x8x1xf32> to vector<2x1xf32>
    %23 = vector.shape_cast %22 : vector<2x1xf32> to vector<2x1x1xf32>
    %24 = vector.broadcast %23 : vector<2x1x1xf32> to vector<2x8x1xf32>
    %25 = arith.subf %21, %24 : vector<2x8x1xf32>
    %26 = math.exp %25 : vector<2x8x1xf32>
    %cst_16 = arith.constant dense<0.000000e+00> : vector<2x1xf32>
    %27 = vector.multi_reduction <add>, %26, %cst_16 [1] : vector<2x8x1xf32> to vector<2x1xf32>
    %28 = vector.shape_cast %27 : vector<2x1xf32> to vector<2x1x1xf32>
    %29 = vector.shape_cast %28 : vector<2x1x1xf32> to vector<2x1xf32>
    %30 = tpu.reciprocal %29 : vector<2x1xf32> -> vector<2x1xf32>
    %31 = vector.broadcast %26 : vector<2x8x1xf32> to vector<2x8x32xf32>
    %32 = arith.mulf %15, %31 : vector<2x8x32xf32>
    %cst_17 = arith.constant dense<0.000000e+00> : vector<2x32xf32>
    %33 = vector.multi_reduction <add>, %32, %cst_17 [1] : vector<2x8x32xf32> to vector<2x32xf32>
    %34 = vector.broadcast %30 : vector<2x1xf32> to vector<2x32xf32>
    %35 = arith.mulf %33, %34 : vector<2x32xf32>
    %c0_18 = arith.constant 0 : index
    %c0_19 = arith.constant 0 : index
    %36 = vector.load %arg7[%c0_18, %c0_19] : memref<2x32xf32, #tpu.memory_space<vmem>>, vector<2x32xf32>
    tpu.vector_store %arg7[%c0_18, %c0_19], %35 {strides = array<i32>} : memref<2x32xf32, #tpu.memory_space<vmem>>, vector<2x32xf32>,
    return
  }
  func.func @transform_0(%arg0: i32) -> (i32, i32, i32) {
    %c0_i32 = arith.constant 0 : i32
    %c0_i32_0 = arith.constant 0 : i32
    %c0_i32_1 = arith.constant 0 : i32
    return %arg0, %c0_i32, %c0_i32_0 : i32, i32, i32
  }
  func.func @transform_1(%arg0: i32) -> (i32, i32) {
    %c0_i32 = arith.constant 0 : i32
    %c0_i32_0 = arith.constant 0 : i32
    %c0_i32_1 = arith.constant 0 : i32
    return %c0_i32, %c0_i32_0 : i32, i32
  }
  func.func @transform_2(%arg0: i32) -> (i32, i32) {
    %c0_i32 = arith.constant 0 : i32
    %c0_i32_0 = arith.constant 0 : i32
    %c0_i32_1 = arith.constant 0 : i32
    return %c0_i32, %c0_i32_0 : i32, i32
  }
  func.func @transform_3(%arg0: i32) -> (i32, i32) {
    %c0_i32 = arith.constant 0 : i32
    %c0_i32_0 = arith.constant 0 : i32
    %c0_i32_1 = arith.constant 0 : i32
    return %c0_i32, %c0_i32_0 : i32, i32
  }
  func.func @transform_4(%arg0: i32) -> (i32, i32) {
    %c0_i32 = arith.constant 0 : i32
    %c0_i32_0 = arith.constant 0 : i32
    %c0_i32_1 = arith.constant 0 : i32
    return %c0_i32, %c0_i32_0 : i32, i32
  }
  func.func @transform_5(%arg0: i32) -> (i32, i32) {
    %c0_i32 = arith.constant 0 : i32
    %c0_i32_0 = arith.constant 0 : i32
    %c0_i32_1 = arith.constant 0 : i32
    return %c0_i32, %c0_i32_0 : i32, i32
  }
  func.func @transform_6(%arg0: i32) -> (i32, i32) {
    %c0_i32 = arith.constant 0 : i32
    %c0_i32_0 = arith.constant 0 : i32
    return %arg0, %c0_i32 : i32, i32
  }
}

</mosaic_0001>

<llo_original>
// kernel: tpu_custom_call.1
$region0: #{tpu_custom_call.1}
  #allocation0 [shape = 'u32[]', space=smem, size = 0x4, offset = 0x4, fixed_abs, tag = 'smem constant byte address 0x4 - core index']
  #allocation1 [shape = 'u32[72,128]{1,0:T(1,128)}', space=vmem, size = 0x9000, scoped, tag = 'internal scratch']
  %s0 = inlined_call_operand.vmem [shape: f32[2,8,32], index: 0, kind: input, shape index: {}]
  %s1 = inlined_call_operand.vmem [shape: f32[32,16], index: 1, kind: input, shape index: {}]
  %s2 = inlined_call_operand.vmem [shape: f32[1,16], index: 2, kind: input, shape index: {}]
  %s3 = inlined_call_operand.vmem [shape: f32[16,32], index: 3, kind: input, shape index: {}]
  %s4 = inlined_call_operand.vmem [shape: f32[1,32], index: 4, kind: input, shape index: {}]
  %s5 = inlined_call_operand.vmem [shape: f32[1,32], index: 5, kind: input, shape index: {}]
  %s6 = inlined_call_operand.hbm [shape: f32[2,32], index: 6, kind: output, shape index: {}]
  %s7 = sld [smem:[#allocation0]]
  $region34: #{tpu_custom_call.1} parent=0
    _
  %s9 = ssub.s32 1, %s7
  %s10 = scalar_select 0, %s9, %s7
  $region1: #{tpu_custom_call.1} parent=0
    #allocation2 [shape = 'u8[1024]{0}', space=vmem, size = 0x400, scoped, tag = 'output window, operand 0, single buffered']
    #allocation3 [shape = 's32[1]{0}', space=sflag, size = 0x4, scoped, tag = 'scoped memory for tpu_custom_call.1']
    %11 = vsyncpa [#allocation3], 0
    // Predicated region
    $region2: #{tpu_custom_call.1} parent=1 // pred_check
      _
    $region3: #{tpu_custom_call.1} parent=1 // pred_check_branch
      %13 = sbr.rel (0) target = $region5
    $region4: #{tpu_custom_call.1} parent=1 // pred_region
      _
    $region5: #{tpu_custom_call.1} parent=1 // pred_fallthru
      _
    // Predicated region
    $region6: #{tpu_custom_call.1} parent=1 // pred_check
      _
    $region7: #{tpu_custom_call.1} parent=1 // pred_check_branch
      %15 = sbr.rel (0) target = $region9
    $region8: #{tpu_custom_call.1} parent=1 // pred_region
      _
    $region9: #{tpu_custom_call.1} parent=1 // pred_fallthru
      _
    // Predicated region
    $region10: #{tpu_custom_call.1} parent=1 // pred_check
      _
    $region11: #{tpu_custom_call.1} parent=1 // pred_check_branch
      %17 = sbr.rel (0) target = $region13
    $region12: #{tpu_custom_call.1} parent=1 // pred_region
      _
    $region13: #{tpu_custom_call.1} parent=1 // pred_fallthru
      _
    // Predicated region
    $region14: #{tpu_custom_call.1} parent=1 // pred_check
      _
    $region15: #{tpu_custom_call.1} parent=1 // pred_check_branch
      %19 = sbr.rel (0) target = $region17
    $region16: #{tpu_custom_call.1} parent=1 // pred_region
      _
    $region17: #{tpu_custom_call.1} parent=1 // pred_fallthru
      _
    // Predicated region
    $region18: #{tpu_custom_call.1} parent=1 // pred_check
      _
    $region19: #{tpu_custom_call.1} parent=1 // pred_check_branch
      %21 = sbr.rel (0) target = $region21
    $region20: #{tpu_custom_call.1} parent=1 // pred_region
      _
    $region21: #{tpu_custom_call.1} parent=1 // pred_fallthru
      _
    // Predicated region
    $region22: #{tpu_custom_call.1} parent=1 // pred_check
      _
    $region23: #{tpu_custom_call.1} parent=1 // pred_check_branch
      %23 = sbr.rel (0) target = $region25
    $region24: #{tpu_custom_call.1} parent=1 // pred_region
      _
    $region25: #{tpu_custom_call.1} parent=1 // pred_fallthru
      _
    %v24 = vld [vmem:[%s0] sm:$0xff]
    %v25 = vld [vmem:[%s0 + $0x8] sm:$0xff]
    %v26 = vld [vmem:[%s1] sm:$0xff]
    %v27 = vld [vmem:[%s1 + $0x8] sm:$0xff]
    %v28 = vld [vmem:[%s1 + $0x10] sm:$0xff]
    %v29 = vld [vmem:[%s1 + $0x18] sm:$0xff]
    %v30 = vld [vmem:[%s3] sm:$0xff]
    %v31 = vld [vmem:[%s3 + $0x8] sm:$0xff]
    %v32 = vld [vmem:[%s2] sm:$0x1]
    %v34 = vperm.slane %v32, 0
    %vm36 = vcmask 261120
    %v38 = vsel %vm36, %v24, 0
    %v41 = vsel %vm36, %v25, 0
    %43 = vmatpush.msra.mxu0 0.0
    %44 = vmatpush.msra.mxu0 0.0
    %45 = vmatpush.msra.mxu0 0.0
    %46 = vmatpush.msra.mxu0 0.0
    %47 = vmatpush.msra.mxu0 0.0
    %48 = vmatpush.msra.mxu0 0.0
    %49 = vmatpush.msra.mxu0 0.0
    %50 = vmatpush.msra.mxu0 0.0
    %51 = vmatpush.msra.mxu0 0.0
    %52 = vmatpush.msra.mxu0 0.0
    %53 = vmatpush.msra.mxu0 0.0
    %54 = vmatpush.msra.mxu0 0.0
    %55 = vmatpush.msra.mxu0 %v29
    %56 = vmatpush.msra.mxu0 %v28
    %57 = vmatpush.msra.mxu0 %v27
    %58 = vmatpush.msra.mxu0 %v26
    %59 = vmatmul.f32.gmra.mxu0 %v38
    %v60 = vpop.f32.mrf.mxu0
    %v61 = vadd.f32 %v34, %v60
    %62 = vmatmul.f32.gmra.mxu0 %v41
    %v63 = vpop.f32.mrf.mxu0
    %v64 = vadd.f32 %v34, %v63
    %65 = vdwg.mxu0
    %v66 = vmax.f32 %v61, 0.0
    %v67 = vmax.f32 %v64, 0.0
    %v68 = vld [vmem:[%s4] sm:$0x1]
    %v70 = vperm.slane %v68, 0
    %vm72 = vcmask 130048
    %v74 = vsel %vm72, %v66, 0
    %v77 = vsel %vm72, %v67, 0
    %79 = vmatpush.msra.mxu0 0.0
    %80 = vmatpush.msra.mxu0 0.0
    %81 = vmatpush.msra.mxu0 0.0
    %82 = vmatpush.msra.mxu0 0.0
    %83 = vmatpush.msra.mxu0 0.0
    %84 = vmatpush.msra.mxu0 0.0
    %85 = vmatpush.msra.mxu0 0.0
    %86 = vmatpush.msra.mxu0 0.0
    %87 = vmatpush.msra.mxu0 0.0
    %88 = vmatpush.msra.mxu0 0.0
    %89 = vmatpush.msra.mxu0 0.0
    %90 = vmatpush.msra.mxu0 0.0
    %91 = vmatpush.msra.mxu0 0.0
    %92 = vmatpush.msra.mxu0 0.0
    %93 = vmatpush.msra.mxu0 %v31
    %94 = vmatpush.msra.mxu0 %v30
    %95 = vmatmul.f32.gmra.mxu0 %v74
    %v96 = vpop.f32.mrf.mxu0
    %v97 = vadd.f32 %v70, %v96
    %98 = vmatmul.f32.gmra.mxu0 %v77
    %v99 = vpop.f32.mrf.mxu0
    %v100 = vadd.f32 %v70, %v99
    %101 = vdwg.mxu0
    %v102 = vtanh.pop %v97
    %v103 = vtanh.pop %v100
    %v104 = vld [vmem:[%s5] sm:$0x1]
    %v106 = vperm.slane %v104, 0
    %v108 = vmul.f32 %v102, %v106
    %v109 = vmul.f32 %v103, %v106
    %v110 = vsel %vm36, %v108, 0.0
    %111 = vadd.xlane.f32.xlu0 %v110
    %v112 = vpop.xlane.xlu0 %111
    %v113 = vsel %vm36, %v109, 0.0
    %114 = vadd.xlane.f32.xlu0 %v113
    %v115 = vpop.xlane.xlu0 %114
    %v116 = vrot.slane %v112, 4
    %v117 = vmax.f32 %v112, %v116
    %v118 = vrot.slane %v117, 2
    %v119 = vmax.f32 %v117, %v118
    %v120 = vrot.slane %v119, 1
    %v121 = vmax.f32 %v119, %v120
    %v122 = vrot.slane %v115, 4
    %v123 = vmax.f32 %v115, %v122
    %v124 = vrot.slane %v123, 2
    %v125 = vmax.f32 %v123, %v124
    %v126 = vrot.slane %v125, 1
    %v127 = vmax.f32 %v125, %v126
    %v128 = vsub.f32 %v112, %v121
    %v129 = vsub.f32 %v115, %v127
    %v130 = vmul.f32 %v128, 1.442695
    %v131 = vpow.pop %v130
    %v132 = vmul.f32 %v129, 1.442695
    %v133 = vpow.pop %v132
    %v134 = vrot.slane %v131, 4
    %v135 = vadd.f32 %v131, %v134
    %v136 = vrot.slane %v135, 2
    %v137 = vadd.f32 %v135, %v136
    %v138 = vrot.slane %v137, 1
    %v139 = vadd.f32 %v137, %v138
    %v140 = vrot.slane %v133, 4
    %v141 = vadd.f32 %v133, %v140
    %v142 = vrot.slane %v141, 2
    %v143 = vadd.f32 %v141, %v142
    %v144 = vrot.slane %v143, 1
    %v145 = vadd.f32 %v143, %v144
    %v146 = vrcp.pop %v139
    %v147 = vmul.f32 %v139, %v146
    %v148 = vsub.f32 1.0, %v147
    %v149 = vmul.f32 %v146, %v148
    %v150 = vadd.f32 %v146, %v149
    %vm151 = vweird.f32 %v139
    %vm152 = vweird.f32 %v146
    %vm153 = vmor %vm151, %vm152
    %v154 = vsel %vm153, %v146, %v150
    %v155 = vand.u32 2147483647, %v139
    %vm156 = vcmp.eq.f32.partialorder %v155, 8.507059e+37
    %v157 = vand.u32 %v139, 2147483648
    %v158 = vor.u32 1.1754944e-38, %v157
    %v159 = vsel %vm156, %v158, %v154
    %v160 = vrcp.pop %v145
    %v161 = vmul.f32 %v145, %v160
    %v162 = vsub.f32 1.0, %v161
    %v163 = vmul.f32 %v160, %v162
    %v164 = vadd.f32 %v160, %v163
    %vm165 = vweird.f32 %v145
    %vm166 = vweird.f32 %v160
    %vm167 = vmor %vm165, %vm166
    %v168 = vsel %vm167, %v160, %v164
    %v169 = vand.u32 2147483647, %v145
    %vm170 = vcmp.eq.f32.partialorder %v169, 8.507059e+37
    %v171 = vand.u32 %v145, 2147483648
    %v172 = vor.u32 1.1754944e-38, %v171
    %v173 = vsel %vm170, %v172, %v168
    %v174 = vmul.f32 %v102, %v131
    %v175 = vmul.f32 %v103, %v133
    %v176 = vsel %vm36, %v174, 0.0
    %v177 = vrot.slane %v176, 4
    %v178 = vadd.f32 %v176, %v177
    %v179 = vrot.slane %v178, 2
    %v180 = vadd.f32 %v178, %v179
    %v181 = vrot.slane %v180, 1
    %v182 = vadd.f32 %v180, %v181
    %v183 = vsel %vm36, %v175, 0.0
    %v184 = vrot.slane %v183, 4
    %v185 = vadd.f32 %v183, %v184
    %v186 = vrot.slane %v185, 2
    %v187 = vadd.f32 %v185, %v186
    %v188 = vrot.slane %v187, 1
    %v189 = vadd.f32 %v187, %v188
    %v190 = vmul.f32 %v182, %v159
    %v191 = vmul.f32 %v189, %v173
    %vm194 = vcmask 1041409
    %v195 = vsel %vm194, %v191, %v190
    %vm197 = vcmask 254976
    %198 = vst.msk [vmem:[#allocation2] sm:$0x3] %vm197, %v195
    // Predicated region
    $region26: #{tpu_custom_call.1} parent=1 // pred_check
      _
    $region27: #{tpu_custom_call.1} parent=1 // pred_check_branch
      %200 = sbr.rel (0) target = $region29
    $region28: #{tpu_custom_call.1} parent=1 // pred_region
      %202 = vsyncadd [#allocation3], 0
      %s204 = sshll.u32 [#allocation2], 4
      %s205 = int_to_ptr.vmem [resolvable:$true] %s204
      %s206 = sshll.u32 %s6, 4
      %s207 = int_to_ptr.hbm [resolvable:$true] %s206
      %209 = dma.vmem_to_hbm [thread:$0]  %s205, 32, %s207, [#allocation3]
    $region29: #{tpu_custom_call.1} parent=1 // pred_fallthru
      _
    // Predicated region
    $region30: #{tpu_custom_call.1} parent=1 // pred_check
      _
    $region31: #{tpu_custom_call.1} parent=1 // pred_check_branch
      %211 = sbr.rel (0) target = $region33
    $region32: #{tpu_custom_call.1} parent=1 // pred_region
      %213 = dma.done [#allocation3], 32
    $region33: #{tpu_custom_call.1} parent=1 // pred_fallthru
      _
    %214 = vsyncpa [#allocation3], 1

</llo_original>
